<compile_context>
chip_gen: v6e
topology: v6e:2x2x1
jax: 0.10.0
libtpu: 0.0.40
codegen_flags: <defaults>
</compile_context>

<pallas_src>
import functools

import numpy as np
import jax
import jax.numpy as jnp
from jax import lax
from jax.experimental import pallas as pl
from jax.experimental.pallas import tpu as pltpu


def _round_up(x, m):
    return ((x + m - 1) // m) * m


def _vmem_capacity_bytes(default=64 * 1024 * 1024):
    """Physical VMEM of the attached TPU; conservative 64 MiB (v7x) fallback."""
    try:
        return int(pltpu.get_tpu_info().vmem_capacity_bytes)
    except Exception:
        return default


_VMEM_CAP = _vmem_capacity_bytes()
# Explicit scoped-VMEM limit for every pallas_call (v5e's default is only 16 MiB).
_VMEM_LIMIT = int(_VMEM_CAP * 0.6)


# ----------------------------------------------------------------------------
# Kernel 1: negative pairwise squared distances (feeds the kNN top-k).
#   neg[r, c] = -(||x_r||^2 + ||x_c||^2 - 2 x_r . x_c)
# Row-tiled: each grid step computes a (TM, N_pad) slab with one MXU matmul.
# Column norms arrive precomputed as a (1, N_pad) row (cheap XLA glue); row
# norms are an O(TM*C) VPU reduce in-kernel.  Padded columns are masked to
# -1e30 so top_k never selects them.
# ----------------------------------------------------------------------------
def _neg_pairwise_dist_kernel(xr_ref, xa_ref, sq_ref, o_ref, *, n_valid):
    rows = xr_ref[0]                                                  # (TM, C)
    x_all = xa_ref[0]                                                 # (N_pad, C)
    inner = lax.dot_general(rows, x_all, (((1,), (1,)), ((), ())),
                            preferred_element_type=jnp.float32)       # (TM, N_pad)
    sq_rows = jnp.sum(rows * rows, axis=1, keepdims=True)             # (TM, 1)
    neg = 2.0 * inner - sq_rows - sq_ref[0]                           # -||x_r - x_c||^2
    col = lax.broadcasted_iota(jnp.int32, neg.shape, 1)
    o_ref[0] = jnp.where(col < n_valid, neg, -1e30)


def neg_pairwise_dist(pc):
    """pc: (B, C, N) f32 -> (B, N_pad, N_pad) f32.
    Columns >= N hold -1e30; rows >= N are padding (slice before use)."""
    B, C, N = pc.shape
    n_pad = _round_up(N, 128)
    tm = next(t for t in (512, 256, 128) if n_pad % t == 0)

    xt = jnp.transpose(pc, (0, 2, 1))                                 # (B, N, C)
    if n_pad != N:
        xt = jnp.pad(xt, ((0, 0), (0, n_pad - N), (0, 0)))
    sq = jnp.sum(xt * xt, axis=-1)[:, None, :]                        # (B, 1, N_pad)

    kern = functools.partial(_neg_pairwise_dist_kernel, n_valid=N)
    return pl.pallas_call(
        kern,
        out_shape=jax.ShapeDtypeStruct((B, n_pad, n_pad), jnp.float32),
        grid=(B, n_pad // tm),
        in_specs=[pl.BlockSpec((1, tm, C), lambda b, i: (b, i, 0)),      # row slab
                  pl.BlockSpec((1, n_pad, C), lambda b, i: (b, 0, 0)),   # all points
                  pl.BlockSpec((1, 1, n_pad), lambda b, i: (b, 0, 0))],  # col norms
        out_specs=pl.BlockSpec((1, tm, n_pad), lambda b, i: (b, i, 0)),
        compiler_params=pltpu.CompilerParams(
            dimension_semantics=("parallel", "parallel"),
            vmem_limit_bytes=_VMEM_LIMIT),
    )(xt, xt, sq)


# ----------------------------------------------------------------------------
# Kernel 2: fused EdgeConv stack, grid = (B, k_chunks).
#   per chunk : conv1 (2C->64, +shift, ReLU), conv2 (64->128, +shift, ReLU),
#               pairwise-tree max over the chunk's k-slabs, max-accumulate
#               into a VMEM accumulator.
#   last chunk: conv3 (128->1024, +shift, ReLU), max over N -> (1, 1024)
#               global feature written to the output.
# BN scales are pre-folded into the (bf16) weights; accumulation is f32.
# ----------------------------------------------------------------------------
def _tree_max(slabs):
    while len(slabs) > 1:
        nxt = [jnp.maximum(slabs[i], slabs[i + 1])
               for i in range(0, len(slabs) - 1, 2)]
        if len(slabs) % 2 == 1:
            nxt.append(slabs[-1])
        slabs = nxt
    return slabs[0]


def _edgeconv_kernel(edge_ref, w1_ref, t1_ref, w2_ref, t2_ref, w3_ref, t3_ref,
                     g_ref, acc_ref, *, n_points, k_chunk):
    j = pl.program_id(1)

    e = edge_ref[0]                                                   # (kc*N, 2C) bf16
    h1 = jnp.dot(e, w1_ref[...], preferred_element_type=jnp.float32)  # (kc*N, 64)
    h1 = jnp.maximum(h1 + t1_ref[...], 0.0)
    h2 = jnp.dot(h1.astype(jnp.bfloat16), w2_ref[...],
                 preferred_element_type=jnp.float32)                  # (kc*N, 128)
    h2 = jnp.maximum(h2 + t2_ref[...], 0.0)

    # pairwise tree max over this chunk's k-slabs (static, 8-aligned slices)
    slabs = [h2[s * n_points:(s + 1) * n_points, :] for s in range(k_chunk)]
    m = _tree_max(slabs)                                              # (N, 128)

    @pl.when(j == 0)
    def _():
        acc_ref[...] = m

    @pl.when(j > 0)
    def _():
        acc_ref[...] = jnp.maximum(acc_ref[...], m)

    @pl.when(j == pl.num_programs(1) - 1)
    def _():
        h3 = jnp.dot(acc_ref[...].astype(jnp.bfloat16), w3_ref[...],
                     preferred_element_type=jnp.float32)              # (N, 1024)
        h3 = jnp.maximum(h3 + t3_ref[...], 0.0)
        g_ref[...] = jnp.max(h3, axis=0, keepdims=True)               # (1, 1024)


def _pick_k_chunk(k_knn, n_points, c2, vmem_cap):
    """Largest divisor of k_knn whose per-chunk working set fits the VMEM budget."""
    lane = lambda c: _round_up(c, 128)
    # residents that do not scale with the chunk: h3, max accumulator,
    # double-buffered conv weights/shifts, double-buffered (1, 1024) output.
    w_bytes = 2 * (c2 * 64 + 64 * 128 + 128 * 1024) + 4 * (64 + 128 + 1024)
    fixed = (4 * n_points * 1024 + 4 * n_points * 128
             + 2 * w_bytes + 2 * 4 * 1024)
    budget = max(0, int(vmem_cap * 0.45) - fixed)
    # per edge-row footprint: double-buffered bf16 edge tile + f32 h1 + f32 h2
    # (tree-max temporaries charged as one extra h2)
    row_bytes = 2 * 2 * lane(c2) + 4 * lane(64) + 2 * 4 * lane(128)
    best = 1
    for kc in range(1, k_knn + 1):
        if k_knn % kc == 0 and kc * n_points * row_bytes <= budget:
            best = kc
    return best


def edgeconv_stack(edge, p, *, n_points, k_knn):
    """edge: (B, k*N, 2C) bf16, k-major rows -> (B, 1024) f32 global feature."""
    B, _, C2 = edge.shape
    kc = _pick_k_chunk(k_knn, n_points, C2, _VMEM_CAP)
    n_chunks = k_knn // kc

    weights = (p["w1"], p["t1"], p["w2"], p["t2"], p["w3"], p["t3"])
    kern = functools.partial(_edgeconv_kernel, n_points=n_points, k_chunk=kc)
    return pl.pallas_call(
        kern,
        out_shape=jax.ShapeDtypeStruct((B, 1024), jnp.float32),
        grid=(B, n_chunks),
        in_specs=[pl.BlockSpec((1, kc * n_points, C2), lambda b, j: (b, j, 0))]
                 + [pl.BlockSpec(w.shape, lambda b, j: (0, 0)) for w in weights],
        out_specs=pl.BlockSpec((1, 1024), lambda b, j: (b, 0)),
        scratch_shapes=[pltpu.VMEM((n_points, 128), jnp.float32)],
        compiler_params=pltpu.CompilerParams(
            dimension_semantics=("parallel", "arbitrary"),
            vmem_limit_bytes=_VMEM_LIMIT),
    )(edge, *weights)


# ----------------------------------------------------------------------------
# Kernel 3: FC head, batched over B (one small call, whole arrays in VMEM).
#   fc1(1024->512)+ReLU, fc2(512->256)+ReLU, fc3(256->K^2, padded to 128).
# ----------------------------------------------------------------------------
def _fc_head_kernel(g_ref, fw1_ref, ft1_ref, fw2_ref, ft2_ref, fw3_ref, fb3_ref,
                    o_ref):
    f = jnp.dot(g_ref[...].astype(jnp.bfloat16), fw1_ref[...],
                preferred_element_type=jnp.float32)
    f = jnp.maximum(f + ft1_ref[...], 0.0)                            # (B, 512)
    f = jnp.dot(f.astype(jnp.bfloat16), fw2_ref[...],
                preferred_element_type=jnp.float32)
    f = jnp.maximum(f + ft2_ref[...], 0.0)                            # (B, 256)
    o_ref[...] = (jnp.dot(f.astype(jnp.bfloat16), fw3_ref[...],
                          preferred_element_type=jnp.float32)
                  + fb3_ref[...])                                     # (B, 128)


def fc_head(g, p):
    """g: (B, 1024) f32 global feature -> (B, 128) f32 (first K^2 lanes valid)."""
    B = g.shape[0]
    out_pad = p["fb3"].shape[1]
    return pl.pallas_call(
        _fc_head_kernel,
        out_shape=jax.ShapeDtypeStruct((B, out_pad), jnp.float32),
        compiler_params=pltpu.CompilerParams(vmem_limit_bytes=_VMEM_LIMIT),
    )(g, p["fw1"], p["ft1"], p["fw2"], p["ft2"], p["fw3"], p["fb3"])


# ----------------------------------------------------------------------------
# Parameter construction (deterministic, synthetic — no checkpoint).
# ----------------------------------------------------------------------------
def _bn_fold(key, c, eps=1e-5):
    k1, k2, k3, k4 = jax.random.split(key, 4)
    gamma = 1.0 + 0.1 * jax.random.normal(k1, (c,), jnp.float32)
    beta = 0.1 * jax.random.normal(k2, (c,), jnp.float32)
    mean = 0.1 * jax.random.normal(k3, (c,), jnp.float32)
    var = 1.0 + 0.1 * jax.random.uniform(k4, (c,), jnp.float32)
    scale = gamma / jnp.sqrt(var + eps)
    shift = beta - mean * scale
    return scale.reshape(1, c), shift.reshape(1, c)


def make_params(key, k_channel=3):
    """Raw eval-mode parameters: f32 weights + folded BN (scale, shift)."""
    ks = jax.random.split(key, 10)
    w = lambda k, i, o: 0.1 * jax.random.normal(k, (i, o), jnp.float32)
    p = {}
    p["w1"] = w(ks[0], 2 * k_channel, 64);  p["s1"], p["t1"] = _bn_fold(ks[1], 64)
    p["w2"] = w(ks[2], 64, 128);            p["s2"], p["t2"] = _bn_fold(ks[3], 128)
    p["w3"] = w(ks[4], 128, 1024);          p["s3"], p["t3"] = _bn_fold(ks[5], 1024)
    p["fw1"] = w(ks[6], 1024, 512);         p["fs1"], p["ft1"] = _bn_fold(ks[7], 512)
    p["fw2"] = w(ks[8], 512, 256);          p["fs2"], p["ft2"] = _bn_fold(ks[9], 256)
    # fc3: weight filled with 0, bias = eye(K).flatten(), no BN / activation
    p["fw3"] = jnp.zeros((256, k_channel * k_channel), jnp.float32)
    p["fb3"] = jnp.eye(k_channel, dtype=jnp.float32).reshape(1, -1)
    return p


def prepare_params(p):
    """Fold BN scales into the weights, cast matmul weights to bf16, and pad
    the fc3 weight/bias to a lane-dense 128-wide output."""
    q = {}
    q["w1"] = (p["w1"] * p["s1"]).astype(jnp.bfloat16);    q["t1"] = p["t1"]
    q["w2"] = (p["w2"] * p["s2"]).astype(jnp.bfloat16);    q["t2"] = p["t2"]
    q["w3"] = (p["w3"] * p["s3"]).astype(jnp.bfloat16);    q["t3"] = p["t3"]
    q["fw1"] = (p["fw1"] * p["fs1"]).astype(jnp.bfloat16); q["ft1"] = p["ft1"]
    q["fw2"] = (p["fw2"] * p["fs2"]).astype(jnp.bfloat16); q["ft2"] = p["ft2"]
    out_dim = p["fw3"].shape[1]
    pad = _round_up(out_dim, 128) - out_dim
    q["fw3"] = jnp.pad(p["fw3"], ((0, 0), (0, pad))).astype(jnp.bfloat16)
    q["fb3"] = jnp.pad(p["fb3"], ((0, 0), (0, pad)))
    return q


# ----------------------------------------------------------------------------
# Glue + full forward pass of transform_net.
# ----------------------------------------------------------------------------
def knn_edge_features(pc, *, k_knn):
    """pc: (B, C, N) f32 -> edge features (B, k*N, 2C) bf16, k-major rows."""
    B, C, N = pc.shape
    neg = neg_pairwise_dist(pc)[:, :N, :]                             # (B, N, N_pad)
    # TODO(synk): torch.topk index selection + neighbor gather have no clean
    # Pallas equivalent; done with jax.lax.top_k + advanced indexing in XLA glue.
    _, idx = jax.lax.top_k(neg, k_knn)                                # (B, N, k)
    topk = jax.vmap(lambda f, i: f[:, i])(pc, idx)                    # (B, C, N, k)
    center = jnp.broadcast_to(pc[:, :, :, None], (B, C, N, k_knn))
    edge = jnp.concatenate([center, topk - center], axis=1)           # (B, 2C, N, k)
    # NCHW-style (B, 2C, N, k) -> channels-last, k-major rows; bf16 for the MXU.
    edge = jnp.transpose(edge, (0, 3, 2, 1)).reshape(B, k_knn * N, 2 * C)
    return edge.astype(jnp.bfloat16)


def transform_net_forward(pc, kparams, *, k_knn, k_channel=3):
    B, C, N = pc.shape
    assert N % 8 == 0, "N must be a multiple of 8 for the TPU tiling"
    pc = pc.astype(jnp.float32)
    edge = knn_edge_features(pc, k_knn=k_knn)
    g = edgeconv_stack(edge, kparams, n_points=N, k_knn=k_knn)        # (B, 1024)
    out = fc_head(g, kparams)                                         # (B, 128)
    kk = k_channel * k_channel
    return out[:, :kk].reshape(B, k_channel, k_channel)


# ----------------------------------------------------------------------------
# Pure-jnp reference for the conv/fc stack (same bf16 casts as the kernels).
# ----------------------------------------------------------------------------
def _mm_ref(x, w):
    return lax.dot_general(x.astype(jnp.bfloat16), w,
                           (((x.ndim - 1,), (0,)), ((), ())),
                           preferred_element_type=jnp.float32)


def transform_stack_ref(edge, p, *, n_points, k_knn):
    B = edge.shape[0]
    h1 = jnp.maximum(_mm_ref(edge, p["w1"]) + p["t1"], 0.0)
    h2 = jnp.maximum(_mm_ref(h1, p["w2"]) + p["t2"], 0.0)             # (B, k*N, 128)
    h2 = h2.reshape(B, k_knn, n_points, 128).max(axis=1)              # (B, N, 128)
    h3 = jnp.maximum(_mm_ref(h2, p["w3"]) + p["t3"], 0.0)             # (B, N, 1024)
    g = h3.max(axis=1)                                                # (B, 1024)
    f = jnp.maximum(_mm_ref(g, p["fw1"]) + p["ft1"], 0.0)
    f = jnp.maximum(_mm_ref(f, p["fw2"]) + p["ft2"], 0.0)
    return _mm_ref(f, p["fw3"]) + p["fb3"]                            # (B, 128)


if __name__ == "__main__":
    B, C, N, K_KNN, K_CH = 2, 3, 64, 20, 3

    key = jax.random.PRNGKey(0)
    k_pc, k_par, k_fc3 = jax.random.split(key, 3)
    pc = jax.random.normal(k_pc, (B, C, N), dtype=jnp.float32)        # B x 3 x N

    # 1) pairwise-distance kernel vs float64 numpy reference
    nd = jax.block_until_ready(neg_pairwise_dist(pc))
    pc64 = np.asarray(pc, dtype=np.float64)
    sq = np.sum(pc64 ** 2, axis=1)                                    # (B, N)
    inner = np.einsum("bcn,bcm->bnm", pc64, pc64)
    ref_nd = -(sq[:, :, None] + sq[:, None, :] - 2.0 * inner)
    np.testing.assert_allclose(np.asarray(nd)[:, :N, :N], ref_nd,
                               rtol=1e-2, atol=1e-2)

    # 2) spec fc3 (zero weight, identity bias): transform must be exactly eye(3)
    params = prepare_params(make_params(k_par, k_channel=K_CH))
    out = jax.block_until_ready(
        transform_net_forward(pc, params, k_knn=K_KNN, k_channel=K_CH))
    assert out.shape == (B, K_CH, K_CH)
    np.testing.assert_allclose(
        np.asarray(out),
        np.broadcast_to(np.eye(K_CH, dtype=np.float32), (B, K_CH, K_CH)),
        atol=1e-5)

    # 3) non-trivial fc3: Pallas stack vs jnp reference with identical bf16 casts
    raw = make_params(k_par, k_channel=K_CH)
    kf1, kf2 = jax.random.split(k_fc3)
    raw["fw3"] = 0.02 * jax.random.normal(kf1, raw["fw3"].shape, jnp.float32)
    raw["fb3"] = raw["fb3"] + 0.05 * jax.random.normal(kf2, raw["fb3"].shape,
                                                       jnp.float32)
    q2 = prepare_params(raw)
    edge = knn_edge_features(pc, k_knn=K_KNN)
    g2 = edgeconv_stack(edge, q2, n_points=N, k_knn=K_KNN)
    out2 = jax.block_until_ready(fc_head(g2, q2))
    ref2 = jax.block_until_ready(
        transform_stack_ref(edge, q2, n_points=N, k_knn=K_KNN))
    np.testing.assert_allclose(np.asarray(out2), np.asarray(ref2),
                               rtol=3e-2, atol=3e-2)

    print("KERNEL_OK")
</pallas_src>

<mosaic_0001>
module attributes {stable_mosaic.version = 11 : i64} {
  func.func @_neg_pairwise_dist_kernel(%arg0: i32, %arg1: i32, %arg2: memref<1x128x3xf32, #tpu.memory_space<vmem>>, %arg3: memref<1x128x3xf32, #tpu.memory_space<vmem>>, %arg4: memref<1x1x128xf32, #tpu.memory_space<vmem>>, %arg5: memref<1x128x128xf32, #tpu.memory_space<vmem>>) attributes {dimension_semantics = [#tpu.dimension_semantics<parallel>, #tpu.dimension_semantics<parallel>], iteration_bounds = array<i64: 2, 1>, scalar_prefetch = 0 : i64, scratch_operands = 0 : i64, tpu.core_type = #tpu.core_type<tc>, window_params = [{transform_indices = @transform_0, window_bounds = array<i64: 1, 128, 3>}, {transform_indices = @transform_1, window_bounds = array<i64: 1, 128, 3>}, {transform_indices = @transform_2, window_bounds = array<i64: 1, 1, 128>}, {transform_indices = @transform_3, window_bounds = array<i64: 1, 128, 128>}]} {
    %c0 = arith.constant 0 : index
    %c0_0 = arith.constant 0 : index
    %c0_1 = arith.constant 0 : index
    %0 = vector.load %arg2[%c0, %c0_0, %c0_1] : memref<1x128x3xf32, #tpu.memory_space<vmem>>, vector<1x128x3xf32>
    %1 = vector.shape_cast %0 : vector<1x128x3xf32> to vector<128x3xf32>
    %c0_2 = arith.constant 0 : index
    %c0_3 = arith.constant 0 : index
    %c0_4 = arith.constant 0 : index
    %2 = vector.load %arg3[%c0_2, %c0_3, %c0_4] : memref<1x128x3xf32, #tpu.memory_space<vmem>>, vector<1x128x3xf32>
    %3 = vector.shape_cast %2 : vector<1x128x3xf32> to vector<128x3xf32>
    %cst = arith.constant dense<0.000000e+00> : vector<128x128xf32>
    %4 = tpu.matmul %1, %3, %cst {dimension_numbers = #tpu.dot_dimension_numbers<[1], [1], [0], [0], [0, 0, 1, 0], [], []>} : vector<128x3xf32>, vector<128x3xf32>, vector<128x128xf32> -> vector<128x128xf32>
    %5 = arith.mulf %1, %1 : vector<128x3xf32>
    %cst_5 = arith.constant dense<0.000000e+00> : vector<128xf32>
    %6 = vector.multi_reduction <add>, %5, %cst_5 [1] : vector<128x3xf32> to vector<128xf32>
    %7 = vector.shape_cast %6 : vector<128xf32> to vector<128x1xf32>
    %cst_6 = arith.constant 2.000000e+00 : f32
    %8 = vector.broadcast %cst_6 : f32 to vector<128x128xf32>
    %9 = arith.mulf %8, %4 : vector<128x128xf32>
    %10 = vector.broadcast %7 : vector<128x1xf32> to vector<128x128xf32>
    %11 = arith.subf %9, %10 : vector<128x128xf32>
    %c0_7 = arith.constant 0 : index
    %c0_8 = arith.constant 0 : index
    %c0_9 = arith.constant 0 : index
    %12 = vector.load %arg4[%c0_7, %c0_8, %c0_9] : memref<1x1x128xf32, #tpu.memory_space<vmem>>, vector<1x1x128xf32>
    %13 = vector.shape_cast %12 : vector<1x1x128xf32> to vector<1x128xf32>
    %14 = vector.broadcast %13 : vector<1x128xf32> to vector<128x128xf32>
    %15 = arith.subf %11, %14 : vector<128x128xf32>
    %16 = tpu.iota {dimensions = array<i32: 1>} : vector<128x128xi32>
    %c64_i32 = arith.constant 64 : i32
    %17 = vector.broadcast %c64_i32 : i32 to vector<128x128xi32>
    %18 = arith.cmpi slt, %16, %17 : vector<128x128xi32>
    %cst_10 = arith.constant -1.000000e+30 : f32
    %19 = vector.broadcast %cst_10 : f32 to vector<128x128xf32>
    %20 = arith.select %18, %15, %19 : vector<128x128xi1>, vector<128x128xf32>
    %c0_11 = arith.constant 0 : index
    %c0_12 = arith.constant 0 : index
    %c0_13 = arith.constant 0 : index
    %21 = vector.load %arg5[%c0_11, %c0_12, %c0_13] : memref<1x128x128xf32, #tpu.memory_space<vmem>>, vector<1x128x128xf32>
    %22 = vector.shape_cast %21 : vector<1x128x128xf32> to vector<128x128xf32>
    %23 = vector.shape_cast %20 : vector<128x128xf32> to vector<1x128x128xf32>
    tpu.vector_store %arg5[%c0_11, %c0_12, %c0_13], %23 {strides = array<i32>} : memref<1x128x128xf32, #tpu.memory_space<vmem>>, vector<1x128x128xf32>,
    return
  }
  func.func @transform_0(%arg0: i32, %arg1: i32) -> (i32, i32, i32) {
    %c0_i32 = arith.constant 0 : i32
    %c0_i32_0 = arith.constant 0 : i32
    return %arg0, %arg1, %c0_i32 : i32, i32, i32
  }
  func.func @transform_1(%arg0: i32, %arg1: i32) -> (i32, i32, i32) {
    %c0_i32 = arith.constant 0 : i32
    %c0_i32_0 = arith.constant 0 : i32
    %c0_i32_1 = arith.constant 0 : i32
    return %arg0, %c0_i32, %c0_i32_0 : i32, i32, i32
  }
  func.func @transform_2(%arg0: i32, %arg1: i32) -> (i32, i32, i32) {
    %c0_i32 = arith.constant 0 : i32
    %c0_i32_0 = arith.constant 0 : i32
    %c0_i32_1 = arith.constant 0 : i32
    return %arg0, %c0_i32, %c0_i32_0 : i32, i32, i32
  }
  func.func @transform_3(%arg0: i32, %arg1: i32) -> (i32, i32, i32) {
    %c0_i32 = arith.constant 0 : i32
    %c0_i32_0 = arith.constant 0 : i32
    return %arg0, %arg1, %c0_i32 : i32, i32, i32
  }
}

</mosaic_0001>

<llo_original>
// kernel: tpu_custom_call.1
$region0: #{tpu_custom_call.1}
  #allocation0 [shape = 'u32[]', space=smem, size = 0x4, offset = 0x4, fixed_abs, tag = 'smem constant byte address 0x4 - core index']
  #allocation1 [shape = 'u32[144,128]{1,0:T(1,128)}', space=vmem, size = 0x12000, scoped, tag = 'internal scratch']
  %s0 = inlined_call_operand.vmem [shape: f32[2,128,3], index: 0, kind: input, shape index: {}]
  %s1 = inlined_call_operand.vmem [shape: f32[2,128,3], index: 1, kind: input, shape index: {}]
  %s2 = inlined_call_operand.vmem [shape: f32[2,1,128], index: 2, kind: input, shape index: {}]
  %s3 = inlined_call_operand.hbm [shape: f32[2,128,128], index: 3, kind: output, shape index: {}]
  %s4 = sld [smem:[#allocation0]]
  $region45: #{tpu_custom_call.1} parent=0
    _
  %s6 = ssub.s32 1, %s4
  %s7 = scalar_select 0, %s6, %s4
  $region1: #{tpu_custom_call.1} parent=0
    #allocation2 [shape = 'u8[131072]{0}', space=vmem, size = 0x20000, scoped, tag = 'output window, operand 0']
    #allocation3 [shape = 's32[2]{0}', space=sflag, size = 0x8, scoped, tag = 'scoped memory for tpu_custom_call.1']
    %8 = vsyncpa [#allocation3], 0
    %s9 = scalar_lea.sflag [#allocation3], 1
    %10 = vsyncpa %s9, 0
    loop: start=0, step=1, limit=4
    $region2: #{tpu_custom_call.1} parent=1 // loop_pre_header
      _
    $region3: #{tpu_custom_call.1} parent=1 // loop_header
      %s12 = sphi 0, %s16
      %p13 = scmp.ge.s32.totalorder %s12, 4
      %s19 = sphi 0, %s31
      %s20 = sphi 0, %s27
      %s21 = sphi 0, %s19
      %s22 = sphi 0, %s20
      %s23 = sphi 0, %s21
      %s24 = sphi 0, %s22
      %s36 = sphi 0, %s38
      %s39 = sphi 0, %s36
      %s40 = sphi 0, %s39
      %s56 = sphi 0, %s40
      %s62 = sphi 0, %s64
      %s65 = sphi 0, %s62
      %s66 = sphi 0, %s65
      %s82 = sphi 0, %s66
      %s88 = sphi 0, %s90
      %s91 = sphi 0, %s88
      %s92 = sphi 0, %s91
      %s108 = sphi 0, %s92
      %s116 = sphi 0, %s118
      %s119 = sphi 0, %s116
      %s120 = sphi 0, %s119
      %s136 = sphi 0, %s120
    $region4: #{tpu_custom_call.1} parent=1 // loop_header_branch
      %15 = sbr.rel (%p13) target = $region8
    $region5: #{tpu_custom_call.1} parent=1 // loop_body
      %s17 = ssub.s32 %s12, 1
      %s18 = ssub.s32 %s12, 2
      %s25 = sadd.s32 1, %s20
      %p26 = scmp.ge.s32.totalorder %s25, 1
      %s27 = scalar_select %p26, 0, %s25
      %s28 = sadd.s32 1, %s19
      %s29 = scalar_select %p26, %s28, %s19
      %p30 = scmp.ge.s32.totalorder %s29, 2
      %s31 = scalar_select %p30, 0, %s29
      %s32 = ssub.s32 %s19, %s31
      %s33 = ssub.s32 %s20, %s27
      %s34 = sor.u32 %s32, %s33
      %p35 = scmp.eq.s32.totalorder %s34, 0
      %s37 = sadd.s32 %s36, 1
      %s38 = scalar_select %p35, %s36, %s37
      %p41 = pneg %p35
      %p42 = scmp.eq.s32.totalorder %s12, 1
      %p43 = por %p41, %p42
      %p44 = scmp.ne.s32.totalorder %s36, %s39
      %p45 = scmp.eq.s32.totalorder %s12, 0
      %p46 = por %p44, %p45
      %p47 = scmp.ne.s32.totalorder %s36, %s39
      %p48 = scmp.eq.s32.totalorder %s17, 1
      %p49 = por %p47, %p48
      %p50 = scmp.ne.s32.totalorder %s39, %s40
      %p51 = scmp.eq.s32.totalorder %s17, 0
      %p52 = por %p50, %p51
      %p53 = scmp.ne.s32.totalorder %s39, %s40
      %p54 = scmp.eq.s32.totalorder %s18, 1
      %p55 = por %p53, %p54
      %p57 = scmp.ne.s32.totalorder %s40, %s56
      %p58 = scmp.eq.s32.totalorder %s18, 0
      %p59 = por %p57, %p58
      %s60 = ssub.s32 %s19, %s31
      %p61 = scmp.eq.s32.totalorder %s60, 0
      %s63 = sadd.s32 %s62, 1
      %s64 = scalar_select %p61, %s62, %s63
      %p67 = pneg %p61
      %p68 = scmp.eq.s32.totalorder %s12, 1
      %p69 = por %p67, %p68
      %p70 = scmp.ne.s32.totalorder %s62, %s65
      %p71 = scmp.eq.s32.totalorder %s12, 0
      %p72 = por %p70, %p71
      %p73 = scmp.ne.s32.totalorder %s62, %s65
      %p74 = scmp.eq.s32.totalorder %s17, 1
      %p75 = por %p73, %p74
      %p76 = scmp.ne.s32.totalorder %s65, %s66
      %p77 = scmp.eq.s32.totalorder %s17, 0
      %p78 = por %p76, %p77
      %p79 = scmp.ne.s32.totalorder %s65, %s66
      %p80 = scmp.eq.s32.totalorder %s18, 1
      %p81 = por %p79, %p80
      %p83 = scmp.ne.s32.totalorder %s66, %s82
      %p84 = scmp.eq.s32.totalorder %s18, 0
      %p85 = por %p83, %p84
      %s86 = ssub.s32 %s19, %s31
      %p87 = scmp.eq.s32.totalorder %s86, 0
      %s89 = sadd.s32 %s88, 1
      %s90 = scalar_select %p87, %s88, %s89
      %p93 = pneg %p87
      %p94 = scmp.eq.s32.totalorder %s12, 1
      %p95 = por %p93, %p94
      %p96 = scmp.ne.s32.totalorder %s88, %s91
      %p97 = scmp.eq.s32.totalorder %s12, 0
      %p98 = por %p96, %p97
      %p99 = scmp.ne.s32.totalorder %s88, %s91
      %p100 = scmp.eq.s32.totalorder %s17, 1
      %p101 = por %p99, %p100
      %p102 = scmp.ne.s32.totalorder %s91, %s92
      %p103 = scmp.eq.s32.totalorder %s17, 0
      %p104 = por %p102, %p103
      %p105 = scmp.ne.s32.totalorder %s91, %s92
      %p106 = scmp.eq.s32.totalorder %s18, 1
      %p107 = por %p105, %p106
      %p109 = scmp.ne.s32.totalorder %s92, %s108
      %p110 = scmp.eq.s32.totalorder %s18, 0
      %p111 = por %p109, %p110
      %s112 = ssub.s32 %s19, %s31
      %s113 = ssub.s32 %s20, %s27
      %s114 = sor.u32 %s112, %s113
      %p115 = scmp.eq.s32.totalorder %s114, 0
      %s117 = sadd.s32 %s116, 1
      %s118 = scalar_select %p115, %s116, %s117
      %p121 = pneg %p115
      %p122 = scmp.eq.s32.totalorder %s12, 1
      %p123 = por %p121, %p122
      %p124 = scmp.ne.s32.totalorder %s116, %s119
      %p125 = scmp.eq.s32.totalorder %s12, 0
      %p126 = por %p124, %p125
      %p127 = scmp.ne.s32.totalorder %s116, %s119
      %p128 = scmp.eq.s32.totalorder %s17, 1
      %p129 = por %p127, %p128
      %p130 = scmp.ne.s32.totalorder %s119, %s120
      %p131 = scmp.eq.s32.totalorder %s17, 0
      %p132 = por %p130, %p131
      %p133 = scmp.ne.s32.totalorder %s119, %s120
      %p134 = scmp.eq.s32.totalorder %s18, 1
      %p135 = por %p133, %p134
      %p137 = scmp.ne.s32.totalorder %s120, %s136
      %p138 = scmp.eq.s32.totalorder %s18, 0
      %p139 = por %p137, %p138
      %p140 = scmp.le.s32.totalorder 1, %s12
      %p141 = scmp.lt.s32.totalorder %s12, 3
      %p142 = pnand %p140, %p141
      %p143 = pneg %p142
      // Predicated region
      $region9: #{tpu_custom_call.1} parent=5 // pred_check
        _
      $region10: #{tpu_custom_call.1} parent=5 // pred_check_branch
        %145 = sbr.rel (%p142) target = $region12
      $region11: #{tpu_custom_call.1} parent=5 // pred_region
        %s146 = ssub.s32 %s12, 1
      $region12: #{tpu_custom_call.1} parent=5 // pred_fallthru
        _
      %p147 = scmp.lt.s32.totalorder %s12, 2
      // Predicated region
      $region13: #{tpu_custom_call.1} parent=5 // pred_check
        %p148 = pneg %p147
      $region14: #{tpu_custom_call.1} parent=5 // pred_check_branch
        %150 = sbr.rel (%p148) target = $region16
      $region15: #{tpu_custom_call.1} parent=5 // pred_region
        // Predicated region
        $region17: #{tpu_custom_call.1} parent=15 // pred_check
          %p151 = pneg %p46
        $region18: #{tpu_custom_call.1} parent=15 // pred_check_branch
          %153 = sbr.rel (%p151) target = $region20
        $region19: #{tpu_custom_call.1} parent=15 // pred_region
          %s154 = smul.u32 16, %s20
          %p155 = scmp.lt.s32.totalorder %s19, 1
          %s156 = scalar_select %p155, %s19, 1
          %p157 = scmp.lt.s32.totalorder %s154, 15
          %s158 = scalar_select %p157, %s154, 15
          %s159 = smul.addr %s156, 16
          %s160 = sadd.s32 %s158, %s159
          %s161 = smul.addr %s160, 8
          %s162 = scalar_lea.vmem %s0, %s161
          %s163 = smul.u32 16, %s20
        $region20: #{tpu_custom_call.1} parent=15 // pred_fallthru
          _
        // Predicated region
        $region21: #{tpu_custom_call.1} parent=15 // pred_check
          %p164 = pneg %p72
        $region22: #{tpu_custom_call.1} parent=15 // pred_check_branch
          %166 = sbr.rel (%p164) target = $region24
        $region23: #{tpu_custom_call.1} parent=15 // pred_region
          %p167 = scmp.lt.s32.totalorder %s19, 1
          %s168 = scalar_select %p167, %s19, 1
          %s169 = smul.addr %s168, 16
          %s170 = smul.addr %s169, 8
          %s171 = scalar_lea.vmem %s1, %s170
        $region24: #{tpu_custom_call.1} parent=15 // pred_fallthru
          _
        // Predicated region
        $region25: #{tpu_custom_call.1} parent=15 // pred_check
          %p172 = pneg %p98
        $region26: #{tpu_custom_call.1} parent=15 // pred_check_branch
          %174 = sbr.rel (%p172) target = $region28
        $region27: #{tpu_custom_call.1} parent=15 // pred_region
          %p175 = scmp.lt.s32.totalorder %s19, 1
          %s176 = scalar_select %p175, %s19, 1
          %s177 = scalar_lea.vmem %s2, %s176
        $region28: #{tpu_custom_call.1} parent=15 // pred_fallthru
          _
      $region16: #{tpu_custom_call.1} parent=5 // pred_fallthru
        _
      %p178 = scmp.le.s32.totalorder 1, %s12
      %p179 = scmp.lt.s32.totalorder %s12, 3
      %p180 = pnand %p178, %p179
      %p181 = pneg %p180
      // Predicated region
      $region29: #{tpu_custom_call.1} parent=5 // pred_check
        _
      $region30: #{tpu_custom_call.1} parent=5 // pred_check_branch
        %183 = sbr.rel (%p180) target = $region32
      $region31: #{tpu_custom_call.1} parent=5 // pred_region
        %s184 = ssub.s32 %s12, 1
        %s185 = smul.u32 16, %s22
        %p186 = scmp.lt.s32.totalorder %s21, 1
        %s187 = scalar_select %p186, %s21, 1
        %p188 = scmp.lt.s32.totalorder %s185, 15
        %s189 = scalar_select %p188, %s185, 15
        %s190 = smul.addr %s187, 16
        %s191 = sadd.s32 %s189, %s190
        %s192 = smul.addr %s191, 8
        %s193 = scalar_lea.vmem %s0, %s192
        %p194 = pneg %p52
        %p195 = pneg %p49
        %p196 = scmp.lt.s32.totalorder %s21, 1
        %s197 = scalar_select %p196, %s21, 1
        %s198 = smul.addr %s197, 16
        %s199 = smul.addr %s198, 8
        %s200 = scalar_lea.vmem %s1, %s199
        %p201 = pneg %p78
        %p202 = pneg %p75
        %p203 = scmp.lt.s32.totalorder %s21, 1
        %s204 = scalar_select %p203, %s21, 1
        %s205 = scalar_lea.vmem %s2, %s204
        %p206 = pneg %p104
        %p207 = pneg %p101
        %p208 = pneg %p132
        %p209 = pneg %p129
        %s210 = sand.u32 %s119, 1
        %s211 = scalar_lea.sflag [#allocation3], %s210
        %s212 = sand.u32 %s119, 1
        %s213 = smul.addr %s212, 128
        %s214 = scalar_lea.vmem [#allocation2], %s213
        %s215 = smul.u32 16, %s22
        %p216 = scmp.lt.s32.totalorder %s21, 1
        %s217 = scalar_select %p216, %s21, 1
        %p218 = scmp.lt.s32.totalorder %s215, 15
        %s219 = scalar_select %p218, %s215, 15
        %s220 = smul.addr %s217, 16
        %s221 = sadd.s32 %s219, %s220
        %s222 = smul.addr %s221, 8
        %s223 = scalar_lea.vmem %s0, %s222
        %s224 = smul.u32 16, %s22
        %p225 = scmp.lt.s32.totalorder %s21, 1
        %s226 = scalar_select %p225, %s21, 1
        %s227 = smul.addr %s226, 16
        %s228 = smul.addr %s227, 8
        %s229 = scalar_lea.vmem %s1, %s228
        %p230 = scmp.lt.s32.totalorder %s21, 1
        %s231 = scalar_select %p230, %s21, 1
        %s232 = scalar_lea.vmem %s2, %s231
        %s233 = smul.u32 16, %s22
        %v234 = vld [vmem:[%s223] sm:$0xff]
        %v235 = vld [vmem:[%s223 + $0x8] sm:$0xff]
        %v236 = vld [vmem:[%s223 + $0x10] sm:$0xff]
        %v237 = vld [vmem:[%s223 + $0x18] sm:$0xff]
        %v238 = vld [vmem:[%s223 + $0x20] sm:$0xff]
        %v239 = vld [vmem:[%s223 + $0x28] sm:$0xff]
        %v240 = vld [vmem:[%s223 + $0x30] sm:$0xff]
        %v241 = vld [vmem:[%s223 + $0x38] sm:$0xff]
        %v242 = vld [vmem:[%s223 + $0x40] sm:$0xff]
        %v243 = vld [vmem:[%s223 + $0x48] sm:$0xff]
        %v244 = vld [vmem:[%s223 + $0x50] sm:$0xff]
        %v245 = vld [vmem:[%s223 + $0x58] sm:$0xff]
        %v246 = vld [vmem:[%s223 + $0x60] sm:$0xff]
        %v247 = vld [vmem:[%s223 + $0x68] sm:$0xff]
        %v248 = vld [vmem:[%s223 + $0x70] sm:$0xff]
        %v249 = vld [vmem:[%s223 + $0x78] sm:$0xff]
        %v250 = vld [vmem:[%s229] sm:$0xff]
        %v251 = vld [vmem:[%s229 + $0x8] sm:$0xff]
        %v252 = vld [vmem:[%s229 + $0x10] sm:$0xff]
        %v253 = vld [vmem:[%s229 + $0x18] sm:$0xff]
        %v254 = vld [vmem:[%s229 + $0x20] sm:$0xff]
        %v255 = vld [vmem:[%s229 + $0x28] sm:$0xff]
        %v256 = vld [vmem:[%s229 + $0x30] sm:$0xff]
        %v257 = vld [vmem:[%s229 + $0x38] sm:$0xff]
        %v258 = vld [vmem:[%s229 + $0x40] sm:$0xff]
        %v259 = vld [vmem:[%s229 + $0x48] sm:$0xff]
        %v260 = vld [vmem:[%s229 + $0x50] sm:$0xff]
        %v261 = vld [vmem:[%s229 + $0x58] sm:$0xff]
        %v262 = vld [vmem:[%s229 + $0x60] sm:$0xff]
        %v263 = vld [vmem:[%s229 + $0x68] sm:$0xff]
        %v264 = vld [vmem:[%s229 + $0x70] sm:$0xff]
        %v265 = vld [vmem:[%s229 + $0x78] sm:$0xff]
        %vm266 = vcmask 23552
        %v268 = vsel %vm266, %v234, 0
        %v271 = vsel %vm266, %v235, 0
        %v274 = vsel %vm266, %v236, 0
        %v277 = vsel %vm266, %v237, 0
        %v280 = vsel %vm266, %v238, 0
        %v283 = vsel %vm266, %v239, 0
        %v286 = vsel %vm266, %v240, 0
        %v289 = vsel %vm266, %v241, 0
        %v292 = vsel %vm266, %v242, 0
        %v295 = vsel %vm266, %v243, 0
        %v298 = vsel %vm266, %v244, 0
        %v301 = vsel %vm266, %v245, 0
        %v304 = vsel %vm266, %v246, 0
        %v307 = vsel %vm266, %v247, 0
        %v310 = vsel %vm266, %v248, 0
        %v313 = vsel %vm266, %v249, 0
        %v316 = vsel %vm266, %v250, 0
        %v319 = vsel %vm266, %v251, 0
        %v322 = vsel %vm266, %v252, 0
        %v325 = vsel %vm266, %v253, 0
        %v328 = vsel %vm266, %v254, 0
        %v331 = vsel %vm266, %v255, 0
        %v334 = vsel %vm266, %v256, 0
        %v337 = vsel %vm266, %v257, 0
        %v340 = vsel %vm266, %v258, 0
        %v343 = vsel %vm266, %v259, 0
        %v346 = vsel %vm266, %v260, 0
        %v349 = vsel %vm266, %v261, 0
        %v352 = vsel %vm266, %v262, 0
        %v355 = vsel %vm266, %v263, 0
        %v358 = vsel %vm266, %v264, 0
        %v361 = vsel %vm266, %v265, 0
        %363 = vmatprep.subr.mxu0 0.0
        %364 = vmatpush1.xpose.msra.mxu0 %v361
        %365 = vmatprep.subr.mxu0 0.0
        %366 = vmatpush1.xpose.msra.mxu0 %v358
        %367 = vmatprep.subr.mxu0 0.0
        %368 = vmatpush1.xpose.msra.mxu0 %v355
        %369 = vmatprep.subr.mxu0 0.0
        %370 = vmatpush1.xpose.msra.mxu0 %v352
        %371 = vmatprep.subr.mxu0 0.0
        %372 = vmatpush1.xpose.msra.mxu0 %v349
        %373 = vmatprep.subr.mxu0 0.0
        %374 = vmatpush1.xpose.msra.mxu0 %v346
        %375 = vmatprep.subr.mxu0 0.0
        %376 = vmatpush1.xpose.msra.mxu0 %v343
        %377 = vmatprep.subr.mxu0 0.0
        %378 = vmatpush1.xpose.msra.mxu0 %v340
        %379 = vmatprep.subr.mxu0 0.0
        %380 = vmatpush1.xpose.msra.mxu0 %v337
        %381 = vmatprep.subr.mxu0 0.0
        %382 = vmatpush1.xpose.msra.mxu0 %v334
        %383 = vmatprep.subr.mxu0 0.0
        %384 = vmatpush1.xpose.msra.mxu0 %v331
        %385 = vmatprep.subr.mxu0 0.0
        %386 = vmatpush1.xpose.msra.mxu0 %v328
        %387 = vmatprep.subr.mxu0 0.0
        %388 = vmatpush1.xpose.msra.mxu0 %v325
        %389 = vmatprep.subr.mxu0 0.0
        %390 = vmatpush1.xpose.msra.mxu0 %v322
        %391 = vmatprep.subr.mxu0 0.0
        %392 = vmatpush1.xpose.msra.mxu0 %v319
        %393 = vmatprep.subr.mxu0 0.0
        %394 = vmatpush1.xpose.msra.mxu0 %v316
        %395 = vmatprep.subr.mxu0 0.0
        %396 = vmatpush2.xpose.msra.mxu0 0.0
        %397 = vmatprep.subr.mxu0 0.0
        %398 = vmatpush2.xpose.msra.mxu0 0.0
        %399 = vmatprep.subr.mxu0 0.0
        %400 = vmatpush2.xpose.msra.mxu0 0.0
        %401 = vmatprep.subr.mxu0 0.0
        %402 = vmatpush2.xpose.msra.mxu0 0.0
        %403 = vmatprep.subr.mxu0 0.0
        %404 = vmatpush2.xpose.msra.mxu0 0.0
        %405 = vmatprep.subr.mxu0 0.0
        %406 = vmatpush2.xpose.msra.mxu0 0.0
        %407 = vmatprep.subr.mxu0 0.0
        %408 = vmatpush2.xpose.msra.mxu0 0.0
        %409 = vmatprep.subr.mxu0 0.0
        %410 = vmatpush2.xpose.msra.mxu0 0.0
        %411 = vmatprep.subr.mxu0 0.0
        %412 = vmatpush2.xpose.msra.mxu0 0.0
        %413 = vmatprep.subr.mxu0 0.0
        %414 = vmatpush2.xpose.msra.mxu0 0.0
        %415 = vmatprep.subr.mxu0 0.0
        %416 = vmatpush2.xpose.msra.mxu0 0.0
        %417 = vmatprep.subr.mxu0 0.0
        %418 = vmatpush2.xpose.msra.mxu0 0.0
        %419 = vmatprep.subr.mxu0 0.0
        %420 = vmatpush2.xpose.msra.mxu0 0.0
        %421 = vmatprep.subr.mxu0 0.0
        %422 = vmatpush2.xpose.msra.mxu0 0.0
        %423 = vmatprep.subr.mxu0 0.0
        %424 = vmatpush2.xpose.msra.mxu0 0.0
        %425 = vmatprep.subr.mxu0 0.0
        %426 = vmatpush2.xpose.msra.mxu0 0.0
        %427 = vmatprep.mubr.f32.mxu0 0.0
        %428 = vmatmul.mubr.f32.gmra.mxu0 %v268
        %v429 = vpop.f32.mrf.mxu0
        %v430 = vadd.f32 0.0, %v429
        %v431 = vpop.f32.mrf.mxu0
        %432 = vmatprep.mubr.f32.mxu0 0.0
        %433 = vmatmul.mubr.f32.gmra.mxu0 %v271
        %v434 = vpop.f32.mrf.mxu0
        %v435 = vadd.f32 0.0, %v434
        %v436 = vpop.f32.mrf.mxu0
        %437 = vmatprep.mubr.f32.mxu0 0.0
        %438 = vmatmul.mubr.f32.gmra.mxu0 %v274
        %v439 = vpop.f32.mrf.mxu0
        %v440 = vadd.f32 0.0, %v439
        %v441 = vpop.f32.mrf.mxu0
        %442 = vmatprep.mubr.f32.mxu0 0.0
        %443 = vmatmul.mubr.f32.gmra.mxu0 %v277
        %v444 = vpop.f32.mrf.mxu0
        %v445 = vadd.f32 0.0, %v444
        %v446 = vpop.f32.mrf.mxu0
        %447 = vmatprep.mubr.f32.mxu0 0.0
        %448 = vmatmul.mubr.f32.gmra.mxu0 %v280
        %v449 = vpop.f32.mrf.mxu0
        %v450 = vadd.f32 0.0, %v449
        %v451 = vpop.f32.mrf.mxu0
        %452 = vmatprep.mubr.f32.mxu0 0.0
        %453 = vmatmul.mubr.f32.gmra.mxu0 %v283
        %v454 = vpop.f32.mrf.mxu0
        %v455 = vadd.f32 0.0, %v454
        %v456 = vpop.f32.mrf.mxu0
        %457 = vmatprep.mubr.f32.mxu0 0.0
        %458 = vmatmul.mubr.f32.gmra.mxu0 %v286
        %v459 = vpop.f32.mrf.mxu0
        %v460 = vadd.f32 0.0, %v459
        %v461 = vpop.f32.mrf.mxu0
        %462 = vmatprep.mubr.f32.mxu0 0.0
        %463 = vmatmul.mubr.f32.gmra.mxu0 %v289
        %v464 = vpop.f32.mrf.mxu0
        %v465 = vadd.f32 0.0, %v464
        %v466 = vpop.f32.mrf.mxu0
        %467 = vmatprep.mubr.f32.mxu0 0.0
        %468 = vmatmul.mubr.f32.gmra.mxu0 %v292
        %v469 = vpop.f32.mrf.mxu0
        %v470 = vadd.f32 0.0, %v469
        %v471 = vpop.f32.mrf.mxu0
        %472 = vmatprep.mubr.f32.mxu0 0.0
        %473 = vmatmul.mubr.f32.gmra.mxu0 %v295
        %v474 = vpop.f32.mrf.mxu0
        %v475 = vadd.f32 0.0, %v474
        %v476 = vpop.f32.mrf.mxu0
        %477 = vmatprep.mubr.f32.mxu0 0.0
        %478 = vmatmul.mubr.f32.gmra.mxu0 %v298
        %v479 = vpop.f32.mrf.mxu0
        %v480 = vadd.f32 0.0, %v479
        %v481 = vpop.f32.mrf.mxu0
        %482 = vmatprep.mubr.f32.mxu0 0.0
        %483 = vmatmul.mubr.f32.gmra.mxu0 %v301
        %v484 = vpop.f32.mrf.mxu0
        %v485 = vadd.f32 0.0, %v484
        %v486 = vpop.f32.mrf.mxu0
        %487 = vmatprep.mubr.f32.mxu0 0.0
        %488 = vmatmul.mubr.f32.gmra.mxu0 %v304
        %v489 = vpop.f32.mrf.mxu0
        %v490 = vadd.f32 0.0, %v489
        %v491 = vpop.f32.mrf.mxu0
        %492 = vmatprep.mubr.f32.mxu0 0.0
        %493 = vmatmul.mubr.f32.gmra.mxu0 %v307
        %v494 = vpop.f32.mrf.mxu0
        %v495 = vadd.f32 0.0, %v494
        %v496 = vpop.f32.mrf.mxu0
        %497 = vmatprep.mubr.f32.mxu0 0.0
        %498 = vmatmul.mubr.f32.gmra.mxu0 %v310
        %v499 = vpop.f32.mrf.mxu0
        %v500 = vadd.f32 0.0, %v499
        %v501 = vpop.f32.mrf.mxu0
        %502 = vmatprep.mubr.f32.mxu0 0.0
        %503 = vmatmul.mubr.f32.gmra.mxu0 %v313
        %v504 = vpop.f32.mrf.mxu0
        %v505 = vadd.f32 0.0, %v504
        %v506 = vpop.f32.mrf.mxu0
        %507 = vdwg.mxu0
        %v508 = vmul.f32 %v234, %v234
        %v509 = vmul.f32 %v235, %v235
        %v510 = vmul.f32 %v236, %v236
        %v511 = vmul.f32 %v237, %v237
        %v512 = vmul.f32 %v238, %v238
        %v513 = vmul.f32 %v239, %v239
        %v514 = vmul.f32 %v240, %v240
        %v515 = vmul.f32 %v241, %v241
        %v516 = vmul.f32 %v242, %v242
        %v517 = vmul.f32 %v243, %v243
        %v518 = vmul.f32 %v244, %v244
        %v519 = vmul.f32 %v245, %v245
        %v520 = vmul.f32 %v246, %v246
        %v521 = vmul.f32 %v247, %v247
        %v522 = vmul.f32 %v248, %v248
        %v523 = vmul.f32 %v249, %v249
        %v524 = vsel %vm266, %v508, 0.0
        %525 = vadd.xlane.f32.xlu0 %v524
        %v526 = vpop.xlane.xlu0 %525
        %v527 = vsel %vm266, %v509, 0.0
        %528 = vadd.xlane.f32.xlu0 %v527
        %v529 = vpop.xlane.xlu0 %528
        %v530 = vsel %vm266, %v510, 0.0
        %531 = vadd.xlane.f32.xlu0 %v530
        %v532 = vpop.xlane.xlu0 %531
        %v533 = vsel %vm266, %v511, 0.0
        %534 = vadd.xlane.f32.xlu0 %v533
        %v535 = vpop.xlane.xlu0 %534
        %v536 = vsel %vm266, %v512, 0.0
        %537 = vadd.xlane.f32.xlu0 %v536
        %v538 = vpop.xlane.xlu0 %537
        %v539 = vsel %vm266, %v513, 0.0
        %540 = vadd.xlane.f32.xlu0 %v539
        %v541 = vpop.xlane.xlu0 %540
        %v542 = vsel %vm266, %v514, 0.0
        %543 = vadd.xlane.f32.xlu0 %v542
        %v544 = vpop.xlane.xlu0 %543
        %v545 = vsel %vm266, %v515, 0.0
        %546 = vadd.xlane.f32.xlu0 %v545
        %v547 = vpop.xlane.xlu0 %546
        %v548 = vsel %vm266, %v516, 0.0
        %549 = vadd.xlane.f32.xlu0 %v548
        %v550 = vpop.xlane.xlu0 %549
        %v551 = vsel %vm266, %v517, 0.0
        %552 = vadd.xlane.f32.xlu0 %v551
        %v553 = vpop.xlane.xlu0 %552
        %v554 = vsel %vm266, %v518, 0.0
        %555 = vadd.xlane.f32.xlu0 %v554
        %v556 = vpop.xlane.xlu0 %555
        %v557 = vsel %vm266, %v519, 0.0
        %558 = vadd.xlane.f32.xlu0 %v557
        %v559 = vpop.xlane.xlu0 %558
        %v560 = vsel %vm266, %v520, 0.0
        %561 = vadd.xlane.f32.xlu0 %v560
        %v562 = vpop.xlane.xlu0 %561
        %v563 = vsel %vm266, %v521, 0.0
        %564 = vadd.xlane.f32.xlu0 %v563
        %v565 = vpop.xlane.xlu0 %564
        %v566 = vsel %vm266, %v522, 0.0
        %567 = vadd.xlane.f32.xlu0 %v566
        %v568 = vpop.xlane.xlu0 %567
        %v569 = vsel %vm266, %v523, 0.0
        %570 = vadd.xlane.f32.xlu0 %v569
        %v571 = vpop.xlane.xlu0 %570
        %v572 = vmul.f32 %v430, 2.0
        %v573 = vmul.f32 %v435, 2.0
        %v574 = vmul.f32 %v440, 2.0
        %v575 = vmul.f32 %v445, 2.0
        %v576 = vmul.f32 %v450, 2.0
        %v577 = vmul.f32 %v455, 2.0
        %v578 = vmul.f32 %v460, 2.0
        %v579 = vmul.f32 %v465, 2.0
        %v580 = vmul.f32 %v470, 2.0
        %v581 = vmul.f32 %v475, 2.0
        %v582 = vmul.f32 %v480, 2.0
        %v583 = vmul.f32 %v485, 2.0
        %v584 = vmul.f32 %v490, 2.0
        %v585 = vmul.f32 %v495, 2.0
        %v586 = vmul.f32 %v500, 2.0
        %v587 = vmul.f32 %v505, 2.0
        %v588 = vsub.f32 %v572, %v526
        %v589 = vsub.f32 %v573, %v529
        %v590 = vsub.f32 %v574, %v532
        %v591 = vsub.f32 %v575, %v535
        %v592 = vsub.f32 %v576, %v538
        %v593 = vsub.f32 %v577, %v541
        %v594 = vsub.f32 %v578, %v544
        %v595 = vsub.f32 %v579, %v547
        %v596 = vsub.f32 %v580, %v550
        %v597 = vsub.f32 %v581, %v553
        %v598 = vsub.f32 %v582, %v556
        %v599 = vsub.f32 %v583, %v559
        %v600 = vsub.f32 %v584, %v562
        %v601 = vsub.f32 %v585, %v565
        %v602 = vsub.f32 %v586, %v568
        %v603 = vsub.f32 %v587, %v571
        %v604 = vld [vmem:[%s232] sm:$0x1]
        %v606 = vlaneseq
        %v607 = vshrl.u32 %v606, 7
        %v608 = vsub.s32 0, %v607
        %v609 = vrot.slane %v604, %v608
        %v611 = vsub.f32 %v588, %v609
        %v612 = vsub.f32 %v589, %v609
        %v613 = vsub.f32 %v590, %v609
        %v614 = vsub.f32 %v591, %v609
        %v615 = vsub.f32 %v592, %v609
        %v616 = vsub.f32 %v593, %v609
        %v617 = vsub.f32 %v594, %v609
        %v618 = vsub.f32 %v595, %v609
        %v619 = vsub.f32 %v596, %v609
        %v620 = vsub.f32 %v597, %v609
        %v621 = vsub.f32 %v598, %v609
        %v622 = vsub.f32 %v599, %v609
        %v623 = vsub.f32 %v600, %v609
        %v624 = vsub.f32 %v601, %v609
        %v625 = vsub.f32 %v602, %v609
        %v626 = vsub.f32 %v603, %v609
        %v627 = vlaneseq
        %v628 = vand.u32 %v627, 127
        %vm629 = vcmp.lt.s32.totalorder %v628, 64
        %v630 = vsel %vm629, %v611, -1e+30
        %v631 = vsel %vm629, %v612, -1e+30
        %v632 = vsel %vm629, %v613, -1e+30
        %v633 = vsel %vm629, %v614, -1e+30
        %v634 = vsel %vm629, %v615, -1e+30
        %v635 = vsel %vm629, %v616, -1e+30
        %v636 = vsel %vm629, %v617, -1e+30
        %v637 = vsel %vm629, %v618, -1e+30
        %v638 = vsel %vm629, %v619, -1e+30
        %v639 = vsel %vm629, %v620, -1e+30
        %v640 = vsel %vm629, %v621, -1e+30
        %v641 = vsel %vm629, %v622, -1e+30
        %v642 = vsel %vm629, %v623, -1e+30
        %v643 = vsel %vm629, %v624, -1e+30
        %v644 = vsel %vm629, %v625, -1e+30
        %v645 = vsel %vm629, %v626, -1e+30
        %646 = vst [vmem:[%s214] sm:$0xff] %v630
        %647 = vst [vmem:[%s214 + $0x8] sm:$0xff] %v631
        %648 = vst [vmem:[%s214 + $0x10] sm:$0xff] %v632
        %649 = vst [vmem:[%s214 + $0x18] sm:$0xff] %v633
        %650 = vst [vmem:[%s214 + $0x20] sm:$0xff] %v634
        %651 = vst [vmem:[%s214 + $0x28] sm:$0xff] %v635
        %652 = vst [vmem:[%s214 + $0x30] sm:$0xff] %v636
        %653 = vst [vmem:[%s214 + $0x38] sm:$0xff] %v637
        %654 = vst [vmem:[%s214 + $0x40] sm:$0xff] %v638
        %655 = vst [vmem:[%s214 + $0x48] sm:$0xff] %v639
        %656 = vst [vmem:[%s214 + $0x50] sm:$0xff] %v640
        %657 = vst [vmem:[%s214 + $0x58] sm:$0xff] %v641
        %658 = vst [vmem:[%s214 + $0x60] sm:$0xff] %v642
        %659 = vst [vmem:[%s214 + $0x68] sm:$0xff] %v643
        %660 = vst [vmem:[%s214 + $0x70] sm:$0xff] %v644
        %661 = vst [vmem:[%s214 + $0x78] sm:$0xff] %v645
        %s662 = sand.u32 %s119, 1
        %s663 = scalar_lea.sflag [#allocation3], %s662
        %s664 = sand.u32 %s119, 1
        %s665 = smul.addr %s664, 128
        %s666 = scalar_lea.vmem [#allocation2], %s665
        // Predicated region
        $region33: #{tpu_custom_call.1} parent=31 // pred_check
          %p667 = pneg %p129
        $region34: #{tpu_custom_call.1} parent=31 // pred_check_branch
          %669 = sbr.rel (%p667) target = $region36
        $region35: #{tpu_custom_call.1} parent=31 // pred_region
          %s670 = smul.u32 16, %s22
          %s672 = ssub.s32 2048, 2048
          %673 = vsyncadd %s663, %s672
          %s674 = smul.addr %s21, 16
          %s675 = sadd.s32 %s670, %s674
          %s676 = smul.addr %s675, 128
          %s677 = scalar_lea.hbm %s3, %s676
          %s678 = sshll.u32 %s666, 4
          %s679 = int_to_ptr.vmem [resolvable:$true] %s678
          %684 = dma.vmem_to_hbm [thread:$0]  %s679, 2048, %s677, %s663, 128, 128, 8
        $region36: #{tpu_custom_call.1} parent=31 // pred_fallthru
          _
      $region32: #{tpu_custom_call.1} parent=5 // pred_fallthru
        _
      %p685 = scmp.le.s32.totalorder 2, %s12
      // Predicated region
      $region37: #{tpu_custom_call.1} parent=5 // pred_check
        %p686 = pneg %p685
      $region38: #{tpu_custom_call.1} parent=5 // pred_check_branch
        %688 = sbr.rel (%p686) target = $region40
      $region39: #{tpu_custom_call.1} parent=5 // pred_region
        %s689 = ssub.s32 %s12, 2
        // Predicated region
        $region41: #{tpu_custom_call.1} parent=39 // pred_check
          %p690 = pneg %p135
        $region42: #{tpu_custom_call.1} parent=39 // pred_check_branch
          %692 = sbr.rel (%p690) target = $region44
        $region43: #{tpu_custom_call.1} parent=39 // pred_region
          %s693 = sand.u32 %s120, 1
          %s694 = scalar_lea.sflag [#allocation3], %s693
          %s695 = sand.u32 %s120, 1
          %s696 = smul.addr %s695, 128
          %s697 = scalar_lea.vmem [#allocation2], %s696
          %698 = dma.done %s694, 2048
        $region44: #{tpu_custom_call.1} parent=39 // pred_fallthru
          _
      $region40: #{tpu_custom_call.1} parent=5 // pred_fallthru
        _
    $region6: #{tpu_custom_call.1} parent=1 // loop_footer
      %s16 = sadd.s32 1, %s12
    $region7: #{tpu_custom_call.1} parent=1 // loop_footer_branch
      %11 = sbr.rel target = $region3
    $region8: #{tpu_custom_call.1} parent=1 // loop_exit
      _
    %699 = vsyncpa [#allocation3], 1
    %s700 = scalar_lea.sflag [#allocation3], 1
    %701 = vsyncpa %s700, 1

</llo_original>
